<compile_context>
chip_gen: v7x
topology: tpu7x:2x2x1
jax: 0.10.0
libtpu: 0.0.40
codegen_flags: <defaults>
</compile_context>

<pallas_src>
import functools

import jax
import jax.numpy as jnp
from jax import lax
from jax.experimental import pallas as pl
from jax.experimental.pallas import tpu as pltpu


def _round_up(x, m):
    return (x + m - 1) // m * m


def _pick_col_tile(n, requested, align=128):
    """Largest multiple of `align` that divides n and is <= requested (n % align == 0)."""
    t = min(requested, n)
    t = max(align, (t // align) * align)
    while n % t != 0:
        t -= align
    return t


def _pad_gate_cols(w, H, Hp):
    """Pad last dim 4*H -> 4*Hp, padding each PyTorch gate block [i|f|g|o] separately."""
    if Hp == H:
        return w
    lead = w.shape[:-1]
    w4 = w.reshape(lead + (4, H))
    pad = [(0, 0)] * len(lead) + [(0, 0), (0, Hp - H)]
    return jnp.pad(w4, pad).reshape(lead + (4 * Hp,))


# ---------------------------------------------------------------------------
# One-time parameter preparation: pad + cast weights (no per-forward HBM pass)
# ---------------------------------------------------------------------------
def prepare_params(params, compute_dtype=jnp.bfloat16):
    embed = params["embed"]                       # (V, E) f32
    wih, whh, b = params["wih"], params["whh"], params["b"]
    wout, bout = params["wout"], params["bout"]
    V, E = embed.shape
    H = whh.shape[0]
    Hp = _round_up(H, 128)
    Vp = _round_up(V, 128)
    return {
        "E": E, "H": H, "V": V, "Hp": Hp, "Vp": Vp,
        "embed": embed.astype(compute_dtype),                                              # (V, E)
        "wih":   _pad_gate_cols(wih, H, Hp).astype(compute_dtype),                         # (E, 4Hp)
        "whh":   _pad_gate_cols(jnp.pad(whh, ((0, Hp - H), (0, 0))), H, Hp)
                 .astype(compute_dtype),                                                   # (Hp, 4Hp)
        "b":     _pad_gate_cols(b, H, Hp).astype(jnp.float32),                             # (1, 4Hp)
        "wout":  jnp.pad(wout, ((0, Hp - H), (0, Vp - V))).astype(compute_dtype),          # (Hp, Vp)
        "bout":  jnp.pad(bout, ((0, 0), (0, Vp - V))).astype(jnp.float32),                 # (1, Vp)
    }


# ---------------------------------------------------------------------------
# Parallel tiled matmul-with-bias kernel (input projection / vocab projection)
# ---------------------------------------------------------------------------
def _matmul_bias_kernel(x_ref, w_ref, b_ref, o_ref):
    acc = jnp.dot(x_ref[...], w_ref[...], preferred_element_type=jnp.float32)
    o_ref[...] = (acc + b_ref[...]).astype(o_ref.dtype)


def matmul_bias(x, w, b, *, tm=256, tn=1024, out_dtype=jnp.float32,
                weight_stationary=True):
    """y = x @ w + b with pre-padded weights (N % 128 == 0).

    weight_stationary=True puts the N axis as the OUTER grid dim so each (K, tn)
    weight tile is DMA'd from HBM exactly once (key for the vocab projection where
    W_out is by far the largest operand)."""
    M, K = x.shape
    Kw, N = w.shape
    assert K == Kw and N % 128 == 0 and b.shape == (1, N)

    tn = _pick_col_tile(N, tn, 128)
    tm = min(tm, _round_up(M, 8))
    Mp = _round_up(M, tm)
    if Mp != M:
        x = jnp.pad(x, ((0, Mp - M), (0, 0)))
    gm, gn = Mp // tm, N // tn

    if weight_stationary:
        grid = (gn, gm)
        x_map, w_map = (lambda j, i: (i, 0)), (lambda j, i: (0, j))
        b_map, o_map = (lambda j, i: (0, j)), (lambda j, i: (i, j))
    else:
        grid = (gm, gn)
        x_map, w_map = (lambda i, j: (i, 0)), (lambda i, j: (0, j))
        b_map, o_map = (lambda i, j: (0, j)), (lambda i, j: (i, j))

    out = pl.pallas_call(
        _matmul_bias_kernel,
        out_shape=jax.ShapeDtypeStruct((Mp, N), out_dtype),
        grid_spec=pltpu.PrefetchScalarGridSpec(
            num_scalar_prefetch=0,
            grid=grid,
            in_specs=[
                pl.BlockSpec((tm, K), x_map),   # activation row tile
                pl.BlockSpec((K, tn), w_map),   # weight column tile
                pl.BlockSpec((1, tn), b_map),   # bias column tile
            ],
            out_specs=pl.BlockSpec((tm, tn), o_map),
        ),
        compiler_params=pltpu.CompilerParams(
            dimension_semantics=("parallel", "parallel")),
    )(x, w, b)
    return out[:M] if Mp != M else out


# ---------------------------------------------------------------------------
# Sequential LSTM recurrence kernel (input gates precomputed, time-chunked grid,
# optional leading batch-shard grid axis for 2-TensorCore chips)
# ---------------------------------------------------------------------------
def _lstm_recurrence_kernel(gin_ref, whh_ref, h_seq_ref, h_scr, c_scr, *, unroll=4):
    @pl.when(pl.program_id(1) == 0)            # start of this batch shard's sequence
    def _():
        # nn.LSTM with no initial state -> zero h0 / c0
        h_scr[...] = jnp.zeros_like(h_scr)
        c_scr[...] = jnp.zeros_like(c_scr)

    Hp = h_scr.shape[-1]
    Tb = gin_ref.shape[0]
    w_hh = whh_ref[...]                        # (Hp, 4Hp) bf16, resident across the chunk

    def step(s, carry):
        h, c = carry                           # (Bh, Hp) f32 carries
        gates = gin_ref[s].astype(jnp.float32) + jnp.dot(
            h.astype(w_hh.dtype), w_hh, preferred_element_type=jnp.float32)
        # gate math kept in f32 (v5e has no bf16 VPU/EUP; accuracy on the serial path)
        i_g = jax.nn.sigmoid(gates[:, 0 * Hp:1 * Hp])
        f_g = jax.nn.sigmoid(gates[:, 1 * Hp:2 * Hp])
        g_g = jnp.tanh(gates[:, 2 * Hp:3 * Hp])
        o_g = jax.nn.sigmoid(gates[:, 3 * Hp:4 * Hp])
        c_new = f_g * c + i_g * g_g
        h_new = o_g * jnp.tanh(c_new)
        h_seq_ref[s] = h_new.astype(h_seq_ref.dtype)
        return (h_new, c_new)

    h_fin, c_fin = lax.fori_loop(0, Tb, step, (h_scr[...], c_scr[...]), unroll=unroll)
    h_scr[...] = h_fin
    c_scr[...] = c_fin


def _run_recurrence(gin, whh_p, *, Tp, Bp, Hp, Tb, n_shards, unroll, single_buffer_whh):
    Bh = Bp // n_shards
    if single_buffer_whh:
        # constant index map -> no need to double-buffer W_hh (saves Hp*4Hp*2 bytes VMEM)
        whh_spec = pl.BlockSpec((Hp, 4 * Hp), lambda p, t: (0, 0),
                                pipeline_mode=pl.Buffered(1))
    else:
        whh_spec = pl.BlockSpec((Hp, 4 * Hp), lambda p, t: (0, 0))

    # explicit, footprint-derived VMEM budget (re-derived per config; v7x has 64 MiB)
    gin_blk = Tb * Bh * 4 * Hp * 2                     # bf16 chunk
    hseq_blk = Tb * Bh * Hp * 2                        # bf16 chunk
    whh_bytes = Hp * 4 * Hp * 2 * (1 if single_buffer_whh else 2)
    scratch_bytes = 2 * Bh * Hp * 4
    need = 2 * gin_blk + 2 * hseq_blk + whh_bytes + scratch_bytes
    vmem_limit = int(min(max(need + (8 << 20), 32 << 20), 64 << 20))

    kernel = functools.partial(_lstm_recurrence_kernel, unroll=unroll)
    return pl.pallas_call(
        kernel,
        out_shape=jax.ShapeDtypeStruct((Tp, Bp, Hp), jnp.bfloat16),
        grid_spec=pltpu.PrefetchScalarGridSpec(
            num_scalar_prefetch=0,
            grid=(n_shards, Tp // Tb),
            in_specs=[
                pl.BlockSpec((Tb, Bh, 4 * Hp), lambda p, t: (t, p, 0)),   # precomputed gates
                whh_spec,                                                  # W_hh resident
            ],
            out_specs=pl.BlockSpec((Tb, Bh, Hp), lambda p, t: (t, p, 0)),
            scratch_shapes=[
                pltpu.VMEM((Bh, Hp), jnp.float32),                         # h carry
                pltpu.VMEM((Bh, Hp), jnp.float32),                         # c carry
            ],
        ),
        compiler_params=pltpu.CompilerParams(
            dimension_semantics=("parallel", "arbitrary"),   # batch shards || , time serial
            vmem_limit_bytes=vmem_limit),
    )(gin, whh_p)


# ---------------------------------------------------------------------------
# Forward wrapper (matches DecoderRNN.forward semantics, batch_first output)
# ---------------------------------------------------------------------------
def decoder_rnn_forward(features, captions, prep, *,
                        time_block=16, proj_tm=256, proj_tn=1024, unroll=4):
    """features: (B, E) f32, captions: (B, Tcap) int32. Returns (B, Tcap, V) f32.
    `prep` is the output of prepare_params (weights already padded + cast)."""
    E, V, Hp, Vp = prep["E"], prep["V"], prep["Hp"], prep["Vp"]
    B = features.shape[0]

    # glue (plain JAX): bf16 embedding gather + prepend image features
    # TODO(synk): could fold this gather into stage 1 via scalar-prefetched ids.
    cap_emb = jnp.take(prep["embed"], captions[:, :-1], axis=0)            # (B, T-1, E) bf16
    emb = jnp.concatenate([features.astype(prep["embed"].dtype)[:, None, :], cap_emb], 1)
    T = emb.shape[1]

    # shape hygiene: batch-shard split (2 TensorCores) only when the batch is big enough
    n_shards = 2 if B > 8 else 1
    Bp = _round_up(B, 8 * n_shards)
    Tb = max(1, min(time_block, T))
    Tp = _round_up(T, Tb)

    x = jnp.transpose(emb, (1, 0, 2))                                      # (T, B, E) time-major
    x = jnp.pad(x, ((0, Tp - T), (0, Bp - B), (0, 0)))                     # (Tp, Bp, E)

    # stage 1: hoisted input projection for all timesteps; gin stored bf16
    gin = matmul_bias(x.reshape(Tp * Bp, E), prep["wih"], prep["b"],
                      tm=proj_tm, tn=proj_tn, out_dtype=jnp.bfloat16)      # (Tp*Bp, 4Hp)
    gin = gin.reshape(Tp, Bp, 4 * Hp)

    # stage 2: sequential recurrence (h_seq stored bf16)
    try:
        h_seq = _run_recurrence(gin, prep["whh"], Tp=Tp, Bp=Bp, Hp=Hp, Tb=Tb,
                                n_shards=n_shards, unroll=unroll,
                                single_buffer_whh=True)
    except Exception:
        # fallback if single-buffered pipeline_mode is unsupported on this jax version
        h_seq = _run_recurrence(gin, prep["whh"], Tp=Tp, Bp=Bp, Hp=Hp, Tb=Tb,
                                n_shards=n_shards, unroll=unroll,
                                single_buffer_whh=False)

    # stage 3: transpose the SMALL h_seq to batch-first and drop padded rows, then
    # project to vocab -> logits produced directly in (B, T, V) layout, W_out streamed once.
    h_bt = jnp.transpose(h_seq[:T, :B], (1, 0, 2)).reshape(B * T, Hp)      # bf16, small
    logits = matmul_bias(h_bt, prep["wout"], prep["bout"],
                         tm=proj_tm, tn=proj_tn, out_dtype=jnp.float32,
                         weight_stationary=True)                           # (B*T, Vp) f32
    logits = logits.reshape(B, T, Vp)
    if Vp != V:
        logits = logits[:, :, :V]
    return logits                                                          # (B, T, V)


# ---------------------------------------------------------------------------
# Pure-JAX f32 reference (PyTorch semantics) for correctness checking
# ---------------------------------------------------------------------------
def _reference_forward(features, captions, params):
    embed_tbl = params["embed"]
    wih, whh, b = params["wih"], params["whh"], params["b"]
    wout, bout = params["wout"], params["bout"]
    H = whh.shape[0]

    cap_emb = jnp.take(embed_tbl, captions[:, :-1], axis=0)
    x = jnp.transpose(jnp.concatenate([features[:, None, :], cap_emb], 1), (1, 0, 2))
    B = x.shape[1]

    def step(carry, x_t):
        h, c = carry
        gates = x_t @ wih + h @ whh + b
        i = jax.nn.sigmoid(gates[:, 0 * H:1 * H])
        f = jax.nn.sigmoid(gates[:, 1 * H:2 * H])
        g = jnp.tanh(gates[:, 2 * H:3 * H])
        o = jax.nn.sigmoid(gates[:, 3 * H:4 * H])
        c = f * c + i * g
        h = o * jnp.tanh(c)
        return (h, c), h @ wout + bout

    init = (jnp.zeros((B, H), jnp.float32), jnp.zeros((B, H), jnp.float32))
    _, outs = jax.lax.scan(step, init, x)
    return jnp.transpose(outs, (1, 0, 2))


def init_params(key, embed_size, hidden_size, vocab_size):
    ks = jax.random.split(key, 6)
    s = 0.1
    return {
        "embed": s * jax.random.normal(ks[0], (vocab_size, embed_size), jnp.float32),
        "wih":   s * jax.random.normal(ks[1], (embed_size, 4 * hidden_size), jnp.float32),
        "whh":   s * jax.random.normal(ks[2], (hidden_size, 4 * hidden_size), jnp.float32),
        "b":     s * jax.random.normal(ks[3], (1, 4 * hidden_size), jnp.float32),
        "wout":  s * jax.random.normal(ks[4], (hidden_size, vocab_size), jnp.float32),
        "bout":  s * jax.random.normal(ks[5], (1, vocab_size), jnp.float32),
    }


if __name__ == "__main__":
    def run_case(key, B, Tcap, embed_size, hidden_size, vocab_size):
        kp, kf, kc = jax.random.split(key, 3)
        params = init_params(kp, embed_size, hidden_size, vocab_size)
        prep = prepare_params(params)                      # one-time pad + cast
        features = jax.random.normal(kf, (B, embed_size), jnp.float32)
        captions = jax.random.randint(kc, (B, Tcap), 0, vocab_size, jnp.int32)

        out = jax.block_until_ready(decoder_rnn_forward(features, captions, prep))
        ref = _reference_forward(features, captions, params)
        assert out.shape == (B, Tcap, vocab_size)
        # bf16 MXU operands + bf16 gin/h_seq storage, f32 accumulation -> loose tolerance
        err = float(jnp.max(jnp.abs(out - ref)))
        assert jnp.allclose(out, ref, atol=3e-2, rtol=3e-2), f"max abs err {err}"
        return out

    key0 = jax.random.PRNGKey(0)
    k1, k2 = jax.random.split(key0)
    # small default case
    run_case(k1, B=4, Tcap=8, embed_size=32, hidden_size=32, vocab_size=64)
    # larger batch: exercises the batch-sharded (2-TensorCore) recurrence path + V padding
    run_case(k2, B=16, Tcap=12, embed_size=32, hidden_size=48, vocab_size=200)

    # TODO(synk): DecoderRNN.sample() (greedy autoregressive decode) is not part of
    # forward() and is not implemented here.
    print("KERNEL_OK")
</pallas_src>

<mosaic_0001>
module attributes {stable_mosaic.version = 11 : i64} {
  func.func @_matmul_bias_kernel(%arg0: i32, %arg1: i32, %arg2: memref<64x32xbf16, #tpu.memory_space<vmem>>, %arg3: memref<32x512xbf16, #tpu.memory_space<vmem>>, %arg4: memref<1x512xf32, #tpu.memory_space<vmem>>, %arg5: memref<64x512xbf16, #tpu.memory_space<vmem>>) attributes {dimension_semantics = [#tpu.dimension_semantics<parallel>, #tpu.dimension_semantics<parallel>], iteration_bounds = array<i64: 1, 1>, scalar_prefetch = 0 : i64, scratch_operands = 0 : i64, tpu.core_type = #tpu.core_type<tc>, window_params = [{transform_indices = @transform_0, window_bounds = array<i64: 64, 32>}, {transform_indices = @transform_1, window_bounds = array<i64: 32, 512>}, {transform_indices = @transform_2, window_bounds = array<i64: 1, 512>}, {transform_indices = @transform_3, window_bounds = array<i64: 64, 512>}]} {
    %c0 = arith.constant 0 : index
    %c0_0 = arith.constant 0 : index
    %0 = vector.load %arg2[%c0, %c0_0] : memref<64x32xbf16, #tpu.memory_space<vmem>>, vector<64x32xbf16>
    %c0_1 = arith.constant 0 : index
    %c0_2 = arith.constant 0 : index
    %1 = vector.load %arg3[%c0_1, %c0_2] : memref<32x512xbf16, #tpu.memory_space<vmem>>, vector<32x512xbf16>
    %cst = arith.constant dense<0.000000e+00> : vector<64x512xf32>
    %2 = tpu.matmul %0, %1, %cst {dimension_numbers = #tpu.dot_dimension_numbers<[1], [0], [0], [1], [0, 0, 1, 1], [], []>} : vector<64x32xbf16>, vector<32x512xbf16>, vector<64x512xf32> -> vector<64x512xf32>
    %c0_3 = arith.constant 0 : index
    %c0_4 = arith.constant 0 : index
    %3 = vector.load %arg4[%c0_3, %c0_4] : memref<1x512xf32, #tpu.memory_space<vmem>>, vector<1x512xf32>
    %4 = vector.broadcast %3 : vector<1x512xf32> to vector<64x512xf32>
    %5 = arith.addf %2, %4 : vector<64x512xf32>
    %6 = arith.truncf %5 : vector<64x512xf32> to vector<64x512xbf16>
    %c0_5 = arith.constant 0 : index
    %c0_6 = arith.constant 0 : index
    %7 = vector.load %arg5[%c0_5, %c0_6] : memref<64x512xbf16, #tpu.memory_space<vmem>>, vector<64x512xbf16>
    tpu.vector_store %arg5[%c0_5, %c0_6], %6 {strides = array<i32>} : memref<64x512xbf16, #tpu.memory_space<vmem>>, vector<64x512xbf16>,
    return
  }
  func.func @transform_0(%arg0: i32, %arg1: i32) -> (i32, i32) {
    %c0_i32 = arith.constant 0 : i32
    %c0_i32_0 = arith.constant 0 : i32
    return %arg1, %c0_i32 : i32, i32
  }
  func.func @transform_1(%arg0: i32, %arg1: i32) -> (i32, i32) {
    %c0_i32 = arith.constant 0 : i32
    %c0_i32_0 = arith.constant 0 : i32
    return %c0_i32, %arg0 : i32, i32
  }
  func.func @transform_2(%arg0: i32, %arg1: i32) -> (i32, i32) {
    %c0_i32 = arith.constant 0 : i32
    %c0_i32_0 = arith.constant 0 : i32
    return %c0_i32, %arg0 : i32, i32
  }
  func.func @transform_3(%arg0: i32, %arg1: i32) -> (i32, i32) {
    %c0_i32 = arith.constant 0 : i32
    return %arg1, %arg0 : i32, i32
  }
}

</mosaic_0001>

<llo_original>
// kernel: tpu_custom_call.1
$region0: #{tpu_custom_call.1}
  #allocation0 [shape = 'u32[]', space=smem, size = 0x4, offset = 0x4, fixed_abs, tag = 'smem constant byte address 0x4 - core index']
  #allocation1 [shape = 'u32[144,128]{1,0:T(1,128)}', space=vmem, size = 0x12000, scoped, tag = 'internal scratch']
  %s0 = inlined_call_operand.vmem [shape: bf16[64,32], index: 0, kind: input, shape index: {}]
  %s1 = inlined_call_operand.hbm [shape: bf16[32,512], index: 1, kind: input, shape index: {}]
  %s2 = inlined_call_operand.vmem [shape: f32[1,512], index: 2, kind: input, shape index: {}]
  %s3 = inlined_call_operand.hbm [shape: bf16[64,512], index: 3, kind: output, shape index: {}]
  %s4 = sld [smem:[#allocation0]]
  $region26: #{tpu_custom_call.1} parent=0
    _
  %s6 = ssub.s32 1, %s4
  %s7 = scalar_select 0, %s6, %s4
  $region1: #{tpu_custom_call.1} parent=0
    #allocation2 [shape = 'u8[32768]{0}', space=vmem, size = 0x8000, scoped, tag = 'input window, operand 1, single buffered']
    #allocation3 [shape = 's32[1]{0}', space=sflag, size = 0x4, scoped, tag = 'scoped memory for tpu_custom_call.1']
    #allocation4 [shape = 's32[1]{0}', space=sflag, size = 0x4, scoped, tag = 'scoped memory for tpu_custom_call.1']
    #allocation5 [shape = 'u8[65536]{0}', space=vmem, size = 0x10000, scoped, tag = 'output window, operand 0, single buffered']
    %8 = vsyncpa [#allocation3], 0
    %9 = vsyncpa [#allocation4], 0
    // Predicated region
    $region2: #{tpu_custom_call.1} parent=1 // pred_check
      _
    $region3: #{tpu_custom_call.1} parent=1 // pred_check_branch
      %11 = sbr.rel (0) target = $region5
    $region4: #{tpu_custom_call.1} parent=1 // pred_region
      _
    $region5: #{tpu_custom_call.1} parent=1 // pred_fallthru
      _
    // Predicated region
    $region6: #{tpu_custom_call.1} parent=1 // pred_check
      _
    $region7: #{tpu_custom_call.1} parent=1 // pred_check_branch
      %13 = sbr.rel (0) target = $region9
    $region8: #{tpu_custom_call.1} parent=1 // pred_region
      %s15 = ssub.s32 1024, 1024
      %16 = vsyncadd [#allocation3], %s15
      %s17 = sshll.u32 [#allocation2], 4
      %s18 = int_to_ptr.vmem [resolvable:$true] %s17
      %23 = dma.hbm_to_vmem [thread:$0]  %s1, 1024, %s18, [#allocation3], 256, 256, 16
    $region9: #{tpu_custom_call.1} parent=1 // pred_fallthru
      _
    // Predicated region
    $region10: #{tpu_custom_call.1} parent=1 // pred_check
      _
    $region11: #{tpu_custom_call.1} parent=1 // pred_check_branch
      %25 = sbr.rel (0) target = $region13
    $region12: #{tpu_custom_call.1} parent=1 // pred_region
      _
    $region13: #{tpu_custom_call.1} parent=1 // pred_fallthru
      _
    // Predicated region
    $region14: #{tpu_custom_call.1} parent=1 // pred_check
      _
    $region15: #{tpu_custom_call.1} parent=1 // pred_check_branch
      %27 = sbr.rel (0) target = $region17
    $region16: #{tpu_custom_call.1} parent=1 // pred_region
      %28 = dma.done [#allocation3], 1024
    $region17: #{tpu_custom_call.1} parent=1 // pred_fallthru
      _
    %v30 = vld [vmem:[%s0] sm:$0xf]
    %v31 = vld [vmem:[%s0 + $0x4] sm:$0xf]
    %v32 = vld [vmem:[%s0 + $0x8] sm:$0xf]
    %v33 = vld [vmem:[%s0 + $0xc] sm:$0xf]
    %v34 = vld [vmem:[%s0 + $0x10] sm:$0xf]
    %v35 = vld [vmem:[%s0 + $0x14] sm:$0xf]
    %v36 = vld [vmem:[%s0 + $0x18] sm:$0xf]
    %v37 = vld [vmem:[%s0 + $0x1c] sm:$0xf]
    %v38 = vld [vmem:[#allocation2] sm:$0xff]
    %v39 = vld [vmem:[#allocation2 + $0x8] sm:$0xff]
    %v40 = vld [vmem:[#allocation2 + $0x10] sm:$0xff]
    %v41 = vld [vmem:[#allocation2 + $0x18] sm:$0xff]
    %v42 = vld [vmem:[#allocation2 + $0x20] sm:$0xff]
    %v43 = vld [vmem:[#allocation2 + $0x28] sm:$0xff]
    %v44 = vld [vmem:[#allocation2 + $0x30] sm:$0xff]
    %v45 = vld [vmem:[#allocation2 + $0x38] sm:$0xff]
    %v46 = vld [vmem:[%s2] sm:$0xf]
    %v48 = vlaneseq
    %v49 = vshrl.u32 %v48, 7
    %v50 = vsub.s32 0, %v49
    %v51 = vrot.slane %v46, %v50
    %v52 = vlaneseq
    %v53 = vshrl.u32 %v52, 7
    %v54 = vsub.s32 1, %v53
    %v55 = vrot.slane %v46, %v54
    %v56 = vlaneseq
    %v57 = vshrl.u32 %v56, 7
    %v58 = vsub.s32 2, %v57
    %v59 = vrot.slane %v46, %v58
    %v60 = vlaneseq
    %v61 = vshrl.u32 %v60, 7
    %v62 = vsub.s32 3, %v61
    %v63 = vrot.slane %v46, %v62
    %v76 = vunpack.c.l.b16 %v30
    %v77 = vunpack.c.l.b16 %v31
    %v78 = vunpack.c.l.b16 %v32
    %v79 = vunpack.c.l.b16 %v33
    %v80 = vunpack.c.l.b16 %v34
    %v81 = vunpack.c.l.b16 %v35
    %v82 = vunpack.c.l.b16 %v36
    %v83 = vunpack.c.l.b16 %v37
    %v84 = vpack.c.b16 %v77, %v76
    %v85 = vpack.c.b16 %v79, %v78
    %v86 = vpack.c.b16 %v81, %v80
    %v87 = vpack.c.b16 %v83, %v82
    %v96 = vunpack.c.l.b16 %v38
    %v97 = vunpack.c.h.b16 %v38
    %v98 = vunpack.c.l.b16 %v39
    %v99 = vunpack.c.h.b16 %v39
    %v100 = vunpack.c.l.b16 %v40
    %v101 = vunpack.c.h.b16 %v40
    %v102 = vunpack.c.l.b16 %v41
    %v103 = vunpack.c.h.b16 %v41
    %v104 = vunpack.c.l.b16 %v42
    %v105 = vunpack.c.h.b16 %v42
    %v106 = vunpack.c.l.b16 %v43
    %v107 = vunpack.c.h.b16 %v43
    %v108 = vunpack.c.l.b16 %v44
    %v109 = vunpack.c.h.b16 %v44
    %v110 = vunpack.c.l.b16 %v45
    %v111 = vunpack.c.h.b16 %v45
    %v112 = vpack.c.b16 %v100, %v96
    %v113 = vpack.c.b16 %v101, %v97
    %v114 = vpack.c.b16 %v102, %v98
    %v115 = vpack.c.b16 %v103, %v99
    %v116 = vpack.c.b16 %v108, %v104
    %v117 = vpack.c.b16 %v109, %v105
    %v118 = vpack.c.b16 %v110, %v106
    %v119 = vpack.c.b16 %v111, %v107
    %vm128 = vcmask 261120
    %v130 = vsel %vm128, %v84, 0
    %v133 = vsel %vm128, %v85, 0
    %v136 = vsel %vm128, %v86, 0
    %v139 = vsel %vm128, %v87, 0
    %141 = vmatprep.subr.bf16.mxu0 %v113
    %142 = vmatpush1.bf16.msra.mxu0 %v112
    %143 = vmatprep.subr.bf16.mxu0 %v117
    %144 = vmatpush1.bf16.msra.mxu0 %v116
    %145 = vmatprep.subr.bf16.mxu0 0
    %146 = vmatpush1.bf16.msra.mxu0 0
    %147 = vmatprep.subr.bf16.mxu0 0
    %148 = vmatpush1.bf16.msra.mxu0 0
    %149 = vmatprep.subr.bf16.mxu0 0
    %150 = vmatpush1.bf16.msra.mxu0 0
    %151 = vmatprep.subr.bf16.mxu0 0
    %152 = vmatpush1.bf16.msra.mxu0 0
    %153 = vmatprep.subr.bf16.mxu0 0
    %154 = vmatpush1.bf16.msra.mxu0 0
    %155 = vmatprep.subr.bf16.mxu0 0
    %156 = vmatpush1.bf16.msra.mxu0 0
    %157 = vmatprep.subr.bf16.mxu0 0
    %158 = vmatpush1.bf16.msra.mxu0 0
    %159 = vmatprep.subr.bf16.mxu0 0
    %160 = vmatpush1.bf16.msra.mxu0 0
    %161 = vmatprep.subr.bf16.mxu0 0
    %162 = vmatpush1.bf16.msra.mxu0 0
    %163 = vmatprep.subr.bf16.mxu0 0
    %164 = vmatpush1.bf16.msra.mxu0 0
    %165 = vmatprep.subr.bf16.mxu0 0
    %166 = vmatpush1.bf16.msra.mxu0 0
    %167 = vmatprep.subr.bf16.mxu0 0
    %168 = vmatpush1.bf16.msra.mxu0 0
    %169 = vmatprep.subr.bf16.mxu0 0
    %170 = vmatpush1.bf16.msra.mxu0 0
    %171 = vmatprep.subr.bf16.mxu0 0
    %172 = vmatpush1.bf16.msra.mxu0 0
    %173 = vmatprep.mubr.bf16.mxu0 0
    %174 = vmatmul.mubr.bf16.gmra.mrb[0].mxu0 %v130
    %v175 = vpop.f32.mrb[0].mxu0
    %v176 = vadd.f32 %v51, %v175
    %v177 = vpop.f32.mrb[0].mxu0
    %v178 = vadd.f32 %v55, %v177
    %v179 = vpop.f32.mrb[0].mxu0
    %v180 = vadd.f32 %v51, %v179
    %v181 = vpop.f32.mrb[0].mxu0
    %v182 = vadd.f32 %v55, %v181
    %183 = vmatprep.mubr.bf16.mxu0 0
    %184 = vmatmul.mubr.bf16.gmra.mrb[0].mxu0 %v133
    %v185 = vpop.f32.mrb[0].mxu0
    %v186 = vadd.f32 %v51, %v185
    %v187 = vpop.f32.mrb[0].mxu0
    %v188 = vadd.f32 %v55, %v187
    %v189 = vpop.f32.mrb[0].mxu0
    %v190 = vadd.f32 %v51, %v189
    %v191 = vpop.f32.mrb[0].mxu0
    %v192 = vadd.f32 %v55, %v191
    %193 = vmatprep.mubr.bf16.mxu0 0
    %194 = vmatmul.mubr.bf16.gmra.mrb[0].mxu0 %v136
    %v195 = vpop.f32.mrb[0].mxu0
    %v196 = vadd.f32 %v51, %v195
    %v197 = vpop.f32.mrb[0].mxu0
    %v198 = vadd.f32 %v55, %v197
    %v199 = vpop.f32.mrb[0].mxu0
    %v200 = vadd.f32 %v51, %v199
    %v201 = vpop.f32.mrb[0].mxu0
    %v202 = vadd.f32 %v55, %v201
    %203 = vmatprep.mubr.bf16.mxu0 0
    %204 = vmatmul.mubr.bf16.gmra.mrb[0].mxu0 %v139
    %v205 = vpop.f32.mrb[0].mxu0
    %v206 = vadd.f32 %v51, %v205
    %v207 = vpop.f32.mrb[0].mxu0
    %v208 = vadd.f32 %v55, %v207
    %v209 = vpop.f32.mrb[0].mxu0
    %v210 = vadd.f32 %v51, %v209
    %v211 = vpop.f32.mrb[0].mxu0
    %v212 = vadd.f32 %v55, %v211
    %213 = vdwg.mxu0
    %214 = vmatprep.subr.bf16.mxu0 %v115
    %215 = vmatpush1.bf16.msra.mxu0 %v114
    %216 = vmatprep.subr.bf16.mxu0 %v119
    %217 = vmatpush1.bf16.msra.mxu0 %v118
    %218 = vmatprep.subr.bf16.mxu0 0
    %219 = vmatpush1.bf16.msra.mxu0 0
    %220 = vmatprep.subr.bf16.mxu0 0
    %221 = vmatpush1.bf16.msra.mxu0 0
    %222 = vmatprep.subr.bf16.mxu0 0
    %223 = vmatpush1.bf16.msra.mxu0 0
    %224 = vmatprep.subr.bf16.mxu0 0
    %225 = vmatpush1.bf16.msra.mxu0 0
    %226 = vmatprep.subr.bf16.mxu0 0
    %227 = vmatpush1.bf16.msra.mxu0 0
    %228 = vmatprep.subr.bf16.mxu0 0
    %229 = vmatpush1.bf16.msra.mxu0 0
    %230 = vmatprep.subr.bf16.mxu0 0
    %231 = vmatpush1.bf16.msra.mxu0 0
    %232 = vmatprep.subr.bf16.mxu0 0
    %233 = vmatpush1.bf16.msra.mxu0 0
    %234 = vmatprep.subr.bf16.mxu0 0
    %235 = vmatpush1.bf16.msra.mxu0 0
    %236 = vmatprep.subr.bf16.mxu0 0
    %237 = vmatpush1.bf16.msra.mxu0 0
    %238 = vmatprep.subr.bf16.mxu0 0
    %239 = vmatpush1.bf16.msra.mxu0 0
    %240 = vmatprep.subr.bf16.mxu0 0
    %241 = vmatpush1.bf16.msra.mxu0 0
    %242 = vmatprep.subr.bf16.mxu0 0
    %243 = vmatpush1.bf16.msra.mxu0 0
    %244 = vmatprep.subr.bf16.mxu0 0
    %245 = vmatpush1.bf16.msra.mxu0 0
    %246 = vmatprep.mubr.bf16.mxu0 0
    %247 = vmatmul.mubr.bf16.gmra.mrb[0].mxu0 %v130
    %v248 = vpop.f32.mrb[0].mxu0
    %v249 = vadd.f32 %v59, %v248
    %v250 = vpop.f32.mrb[0].mxu0
    %v251 = vadd.f32 %v63, %v250
    %v252 = vpop.f32.mrb[0].mxu0
    %v253 = vadd.f32 %v59, %v252
    %v254 = vpop.f32.mrb[0].mxu0
    %v255 = vadd.f32 %v63, %v254
    %256 = vmatprep.mubr.bf16.mxu0 0
    %257 = vmatmul.mubr.bf16.gmra.mrb[0].mxu0 %v133
    %v258 = vpop.f32.mrb[0].mxu0
    %v259 = vadd.f32 %v59, %v258
    %v260 = vpop.f32.mrb[0].mxu0
    %v261 = vadd.f32 %v63, %v260
    %v262 = vpop.f32.mrb[0].mxu0
    %v263 = vadd.f32 %v59, %v262
    %v264 = vpop.f32.mrb[0].mxu0
    %v265 = vadd.f32 %v63, %v264
    %266 = vmatprep.mubr.bf16.mxu0 0
    %267 = vmatmul.mubr.bf16.gmra.mrb[0].mxu0 %v136
    %v268 = vpop.f32.mrb[0].mxu0
    %v269 = vadd.f32 %v59, %v268
    %v270 = vpop.f32.mrb[0].mxu0
    %v271 = vadd.f32 %v63, %v270
    %v272 = vpop.f32.mrb[0].mxu0
    %v273 = vadd.f32 %v59, %v272
    %v274 = vpop.f32.mrb[0].mxu0
    %v275 = vadd.f32 %v63, %v274
    %276 = vmatprep.mubr.bf16.mxu0 0
    %277 = vmatmul.mubr.bf16.gmra.mrb[0].mxu0 %v139
    %v278 = vpop.f32.mrb[0].mxu0
    %v279 = vadd.f32 %v59, %v278
    %v280 = vpop.f32.mrb[0].mxu0
    %v281 = vadd.f32 %v63, %v280
    %v282 = vpop.f32.mrb[0].mxu0
    %v283 = vadd.f32 %v59, %v282
    %v284 = vpop.f32.mrb[0].mxu0
    %v285 = vadd.f32 %v63, %v284
    %286 = vdwg.mxu0
    %v287 = vpack.c.bf16 %v180, %v176
    %v288 = vpack.c.bf16 %v182, %v178
    %v289 = vpack.c.bf16 %v253, %v249
    %v290 = vpack.c.bf16 %v255, %v251
    %v291 = vpack.c.bf16 %v190, %v186
    %v292 = vpack.c.bf16 %v192, %v188
    %v293 = vpack.c.bf16 %v263, %v259
    %v294 = vpack.c.bf16 %v265, %v261
    %v295 = vpack.c.bf16 %v200, %v196
    %v296 = vpack.c.bf16 %v202, %v198
    %v297 = vpack.c.bf16 %v273, %v269
    %v298 = vpack.c.bf16 %v275, %v271
    %v299 = vpack.c.bf16 %v210, %v206
    %v300 = vpack.c.bf16 %v212, %v208
    %v301 = vpack.c.bf16 %v283, %v279
    %v302 = vpack.c.bf16 %v285, %v281
    %v319 = vunpack.c.l.b16 %v287
    %v320 = vunpack.c.l.b16 %v288
    %v321 = vunpack.c.l.b16 %v289
    %v322 = vunpack.c.l.b16 %v290
    %v323 = vunpack.c.h.b16 %v287
    %v324 = vunpack.c.h.b16 %v288
    %v325 = vunpack.c.h.b16 %v289
    %v326 = vunpack.c.h.b16 %v290
    %v327 = vunpack.c.l.b16 %v291
    %v328 = vunpack.c.l.b16 %v292
    %v329 = vunpack.c.l.b16 %v293
    %v330 = vunpack.c.l.b16 %v294
    %v331 = vunpack.c.h.b16 %v291
    %v332 = vunpack.c.h.b16 %v292
    %v333 = vunpack.c.h.b16 %v293
    %v334 = vunpack.c.h.b16 %v294
    %v335 = vunpack.c.l.b16 %v295
    %v336 = vunpack.c.l.b16 %v296
    %v337 = vunpack.c.l.b16 %v297
    %v338 = vunpack.c.l.b16 %v298
    %v339 = vunpack.c.h.b16 %v295
    %v340 = vunpack.c.h.b16 %v296
    %v341 = vunpack.c.h.b16 %v297
    %v342 = vunpack.c.h.b16 %v298
    %v343 = vunpack.c.l.b16 %v299
    %v344 = vunpack.c.l.b16 %v300
    %v345 = vunpack.c.l.b16 %v301
    %v346 = vunpack.c.l.b16 %v302
    %v347 = vunpack.c.h.b16 %v299
    %v348 = vunpack.c.h.b16 %v300
    %v349 = vunpack.c.h.b16 %v301
    %v350 = vunpack.c.h.b16 %v302
    %v351 = vpack.c.b16 %v320, %v319
    %v352 = vpack.c.b16 %v322, %v321
    %v353 = vpack.c.b16 %v324, %v323
    %v354 = vpack.c.b16 %v326, %v325
    %v355 = vpack.c.b16 %v328, %v327
    %v356 = vpack.c.b16 %v330, %v329
    %v357 = vpack.c.b16 %v332, %v331
    %v358 = vpack.c.b16 %v334, %v333
    %v359 = vpack.c.b16 %v336, %v335
    %v360 = vpack.c.b16 %v338, %v337
    %v361 = vpack.c.b16 %v340, %v339
    %v362 = vpack.c.b16 %v342, %v341
    %v363 = vpack.c.b16 %v344, %v343
    %v364 = vpack.c.b16 %v346, %v345
    %v365 = vpack.c.b16 %v348, %v347
    %v366 = vpack.c.b16 %v350, %v349
    %383 = vst [vmem:[#allocation5] sm:$0xff] %v351
    %384 = vst [vmem:[#allocation5 + $0x8] sm:$0xff] %v352
    %385 = vst [vmem:[#allocation5 + $0x10] sm:$0xff] %v353
    %386 = vst [vmem:[#allocation5 + $0x18] sm:$0xff] %v354
    %387 = vst [vmem:[#allocation5 + $0x20] sm:$0xff] %v355
    %388 = vst [vmem:[#allocation5 + $0x28] sm:$0xff] %v356
    %389 = vst [vmem:[#allocation5 + $0x30] sm:$0xff] %v357
    %390 = vst [vmem:[#allocation5 + $0x38] sm:$0xff] %v358
    %391 = vst [vmem:[#allocation5 + $0x40] sm:$0xff] %v359
    %392 = vst [vmem:[#allocation5 + $0x48] sm:$0xff] %v360
    %393 = vst [vmem:[#allocation5 + $0x50] sm:$0xff] %v361
    %394 = vst [vmem:[#allocation5 + $0x58] sm:$0xff] %v362
    %395 = vst [vmem:[#allocation5 + $0x60] sm:$0xff] %v363
    %396 = vst [vmem:[#allocation5 + $0x68] sm:$0xff] %v364
    %397 = vst [vmem:[#allocation5 + $0x70] sm:$0xff] %v365
    %398 = vst [vmem:[#allocation5 + $0x78] sm:$0xff] %v366
    // Predicated region
    $region18: #{tpu_custom_call.1} parent=1 // pred_check
      _
    $region19: #{tpu_custom_call.1} parent=1 // pred_check_branch
      %400 = sbr.rel (0) target = $region21
    $region20: #{tpu_custom_call.1} parent=1 // pred_region
      %s402 = ssub.s32 2048, 2048
      %403 = vsyncadd [#allocation4], %s402
      %s404 = sshll.u32 [#allocation5], 4
      %s405 = int_to_ptr.vmem [resolvable:$true] %s404
      %410 = dma.vmem_to_hbm [thread:$0]  %s405, 2048, %s3, [#allocation4], 256, 256, 16
    $region21: #{tpu_custom_call.1} parent=1 // pred_fallthru
      _
    // Predicated region
    $region22: #{tpu_custom_call.1} parent=1 // pred_check
      _
    $region23: #{tpu_custom_call.1} parent=1 // pred_check_branch
      %412 = sbr.rel (0) target = $region25
    $region24: #{tpu_custom_call.1} parent=1 // pred_region
      %413 = dma.done [#allocation4], 2048
    $region25: #{tpu_custom_call.1} parent=1 // pred_fallthru
      _
    %414 = vsyncpa [#allocation3], 1
    %415 = vsyncpa [#allocation4], 1

</llo_original>
